<compile_context>
chip_gen: v6e
topology: v6e:2x2x1
jax: 0.10.0
libtpu: 0.0.40
codegen_flags: <defaults>
</compile_context>

<pallas_src>
import math
import functools

import jax
import jax.numpy as jnp
from jax.experimental import pallas as pl
from jax.experimental.pallas import tpu as pltpu


def _round_up(x: int, m: int) -> int:
    return ((x + m - 1) // m) * m


def _pick_tile(dim: int, pref: int, gran: int) -> int:
    """Tile size (multiple of `gran`, <= `pref`) for an axis of length `dim`.

    If the whole (granularity-rounded) axis fits under `pref`, use a single
    tile. Otherwise start at `pref` and halve while the zero-padding of the
    last tile would exceed ~25% of the padded axis — keeps small problems from
    burning MXU/HBM work on zeros while leaving large axes at the full tile.
    """
    pref = max(gran, (pref // gran) * gran)
    padded = _round_up(max(dim, 1), gran)
    if padded <= pref:
        return padded
    t = pref
    while t > gran and 4 * (_round_up(dim, t) - dim) > _round_up(dim, t):
        t = max(gran, ((t // 2) // gran) * gran)
    return t


# -----------------------------------------------------------------------------
# Kernel: one (tm, tn) output tile of the packed real matmul, K walked by grid.
# -----------------------------------------------------------------------------
def _clinear_kernel(x_ref, w_ref, b_ref, o_ref):
    # The output block index is constant along the k (reduction) axis, so
    # o_ref stays resident in VMEM across the whole K loop: accumulate
    # straight into it (no scratch, no finalize copy).  Bias is folded into
    # the k == 0 init, so it is added exactly once per output tile.
    @pl.when(pl.program_id(2) == 0)
    def _init():
        o_ref[...] = jnp.broadcast_to(b_ref[...], o_ref.shape)

    o_ref[...] += jnp.dot(x_ref[...], w_ref[...],
                          preferred_element_type=jnp.float32)


# -----------------------------------------------------------------------------
# Per-layer packing (done ONCE, like nn.Module parameter setup).
# -----------------------------------------------------------------------------
def pack_clinear_params(w_complex, b_complex=None, *, tn=256, tk=512):
    """complex64 weight (K, N) [+ bias (N,)] -> padded bf16/f32 packed params."""
    K, N = w_complex.shape
    wr = jnp.real(w_complex).astype(jnp.float32)
    wi = jnp.imag(w_complex).astype(jnp.float32)
    w_pack = jnp.concatenate(
        [jnp.concatenate([wr, wi], axis=1),
         jnp.concatenate([-wi, wr], axis=1)], axis=0)            # (2K, 2N) f32

    if b_complex is None:
        b_pack = jnp.zeros((1, 2 * N), jnp.float32)
    else:
        b_pack = jnp.concatenate(
            [jnp.real(b_complex), jnp.imag(b_complex)]
        ).astype(jnp.float32).reshape(1, 2 * N)

    # Lane-axis tiles are a property of the (static) weight shape: fix them
    # here so the weight/bias can be padded once and reused every call.
    tk_e = _pick_tile(2 * K, tk, 128)
    tn_e = _pick_tile(2 * N, tn, 128)
    Kp = _round_up(2 * K, tk_e)
    Np = _round_up(2 * N, tn_e)

    w_pack = jnp.pad(w_pack, ((0, Kp - 2 * K), (0, Np - 2 * N)))
    w_pack = w_pack.astype(jnp.bfloat16)        # bf16 MXU input, cached padded
    b_pack = jnp.pad(b_pack, ((0, 0), (0, Np - 2 * N)))          # f32

    return {"w": w_pack, "b": b_pack, "in": int(K), "out": int(N),
            "tn": int(tn_e), "tk": int(tk_e)}


# -----------------------------------------------------------------------------
# Planar (packed) entry point: bf16/f32 planar in, f32 planar out.
# -----------------------------------------------------------------------------
@functools.partial(jax.jit, static_argnames=("n_out", "tm", "tn", "tk"))
def clinear_packed(x_pack, w_pack, b_pack, *, n_out, tm=256, tn=256, tk=512):
    """x_pack: (M, 2K) [xr|xi]; w_pack: (Kp, Np) padded bf16; b_pack: (1, Np) f32.

    `tn`/`tk` must be the tiles the weight was padded with (pack_clinear_params).
    Returns (M, n_out) f32 with real = y[:, :N], imag = y[:, N:].
    """
    M, K2 = x_pack.shape
    Kp, Np = w_pack.shape
    assert K2 <= Kp and b_pack.shape == (1, Np) and n_out <= Np

    x_pack = x_pack.astype(w_pack.dtype)        # bf16 into the MXU
    b_pack = b_pack.astype(jnp.float32)

    tn_e, tk_e = tn, tk                         # lane tiles fixed by packing
    tm_e = _pick_tile(M, tm, 8)
    Mp = _round_up(M, tm_e)

    # v7x has 2 TensorCores: make sure the 'parallel' part of the grid has at
    # least 2 blocks whenever the problem is splittable (no-op on v5e/v6e;
    # halving tn keeps it a divisor of Np so the cached weight padding holds).
    if (Mp // tm_e) * (Np // tn_e) < 2:
        if tn_e >= 256:
            tn_e //= 2
        elif tm_e >= 16:
            tm_e //= 2
            Mp = _round_up(M, tm_e)

    if (Mp, Kp) != (M, K2):
        x_pack = jnp.pad(x_pack, ((0, Mp - M), (0, Kp - K2)))

    grid = (Mp // tm_e, Np // tn_e, Kp // tk_e)

    # Explicit VMEM budget (double-buffered bf16 X/W tiles + f32 out + bias),
    # kept well under v7x's 64 MiB per-TC VMEM.
    itm = w_pack.dtype.itemsize
    vmem_est = 2 * (tm_e * tk_e * itm + tk_e * tn_e * itm
                    + tn_e * 4 + tm_e * tn_e * 4)
    vmem_limit = int(min(48 * 2**20, max(2 * vmem_est, 32 * 2**20)))

    cost = pl.CostEstimate(
        flops=2 * Mp * Kp * Np,
        transcendentals=0,
        bytes_accessed=(Mp * Kp * itm + Kp * Np * itm + Np * 4 + Mp * Np * 4),
    )

    out = pl.pallas_call(
        _clinear_kernel,
        out_shape=jax.ShapeDtypeStruct((Mp, Np), jnp.float32),
        grid_spec=pltpu.PrefetchScalarGridSpec(
            num_scalar_prefetch=0,
            grid=grid,
            in_specs=[
                pl.BlockSpec((tm_e, tk_e), lambda i, j, k: (i, k)),   # X tile
                pl.BlockSpec((tk_e, tn_e), lambda i, j, k: (k, j)),   # W tile
                pl.BlockSpec((1, tn_e), lambda i, j, k: (0, j)),      # bias row
            ],
            out_specs=pl.BlockSpec((tm_e, tn_e), lambda i, j, k: (i, j)),
        ),
        compiler_params=pltpu.CompilerParams(
            dimension_semantics=("parallel", "parallel", "arbitrary"),
            vmem_limit_bytes=vmem_limit,
        ),
        cost_estimate=cost,
    )(x_pack, w_pack, b_pack)

    return out[:M, :n_out]


# -----------------------------------------------------------------------------
# Complex convenience wrapper matching the PyTorch module's forward semantics.
# (In a real model, keep activations in planar (M, 2K)/(M, 2N) form across
#  layers and call clinear_packed directly to avoid the complex round trips.)
# -----------------------------------------------------------------------------
@functools.partial(jax.jit, static_argnames=("n", "tm", "tn", "tk"))
def _clinear_complex(x_complex, w_pack, b_pack, *, n, tm, tn, tk):
    x_pack = jnp.concatenate(
        [jnp.real(x_complex), jnp.imag(x_complex)], axis=1)       # (M, 2K)
    y = clinear_packed(x_pack, w_pack, b_pack,
                       n_out=2 * n, tm=tm, tn=tn, tk=tk)
    return jax.lax.complex(y[:, :n], y[:, n:])                    # complex64


def clinear(x_complex, params, *, tm=256):
    """x: complex64 (M, K); params from pack_clinear_params."""
    M, K = x_complex.shape
    assert K == params["in"]
    return _clinear_complex(x_complex, params["w"], params["b"],
                            n=params["out"], tm=tm,
                            tn=params["tn"], tk=params["tk"])


# -----------------------------------------------------------------------------
# Parameter init (synthetic mirror of complex kaiming-uniform bounds).
# -----------------------------------------------------------------------------
def init_clinear_params(key, in_features, out_features, bias=True):
    kwr, kwi, kbr, kbi = jax.random.split(key, 4)
    fan_in = in_features
    gain = math.sqrt(2.0)
    bound_w = gain * math.sqrt(3.0 / fan_in)
    wr = jax.random.uniform(kwr, (in_features, out_features), jnp.float32,
                            -bound_w, bound_w)
    wi = jax.random.uniform(kwi, (in_features, out_features), jnp.float32,
                            -bound_w, bound_w)
    w = (wr + 1j * wi).astype(jnp.complex64)
    if bias:
        bound_b = 1.0 / math.sqrt(fan_in)
        br = jax.random.uniform(kbr, (out_features,), jnp.float32,
                                -bound_b, bound_b)
        bi = jax.random.uniform(kbi, (out_features,), jnp.float32,
                                -bound_b, bound_b)
        b = (br + 1j * bi).astype(jnp.complex64)
    else:
        b = None
    return w, b


def _assert_close(got, ref, tol, name):
    err = float(jnp.max(jnp.abs(got - ref)))
    scale = float(jnp.max(jnp.abs(ref))) + 1e-6
    assert err <= tol * scale, f"{name}: rel err {err / scale:.3e} > {tol}"


if __name__ == "__main__":
    key = jax.random.PRNGKey(0)

    # --- Case 1: small shapes matching the module's typical toy usage. -------
    M, IN, OUT = 8, 32, 32
    kx_r, kx_i, kp, kbig = jax.random.split(key, 4)
    xr = jax.random.normal(kx_r, (M, IN), jnp.float32)
    xi = jax.random.normal(kx_i, (M, IN), jnp.float32)
    x = (xr + 1j * xi).astype(jnp.complex64)
    w, b = init_clinear_params(kp, IN, OUT, bias=True)

    params = pack_clinear_params(w, b)           # packed/padded once per layer
    out = jax.block_until_ready(clinear(x, params))
    ref = x @ w + b
    assert out.shape == (M, OUT) and out.dtype == jnp.complex64
    _assert_close(out, ref, tol=2e-2, name="case1")   # bf16-MXU tolerance

    # bias=False path
    params_nb = pack_clinear_params(w, None)
    out_nb = jax.block_until_ready(clinear(x, params_nb))
    _assert_close(out_nb, x @ w, tol=2e-2, name="case1_nobias")

    # --- Case 2: larger (still small) shape exercising multi-block grid,
    #             padding, and the resident-output K accumulation. ------------
    M2, IN2, OUT2 = 256, 192, 160
    k1, k2, k3 = jax.random.split(kbig, 3)
    x2 = (jax.random.normal(k1, (M2, IN2), jnp.float32)
          + 1j * jax.random.normal(k2, (M2, IN2), jnp.float32)).astype(jnp.complex64)
    w2, b2 = init_clinear_params(k3, IN2, OUT2, bias=True)

    params2 = pack_clinear_params(w2, b2)
    out2 = jax.block_until_ready(clinear(x2, params2))
    ref2 = x2 @ w2 + b2
    assert out2.shape == (M2, OUT2) and out2.dtype == jnp.complex64
    _assert_close(out2, ref2, tol=2e-2, name="case2")

    print("KERNEL_OK")
</pallas_src>

<mosaic_0001>
module attributes {stable_mosaic.version = 11 : i64} {
  func.func @_clinear_kernel(%arg0: i32, %arg1: i32, %arg2: i32, %arg3: memref<8x128xbf16, #tpu.memory_space<vmem>>, %arg4: memref<128x128xbf16, #tpu.memory_space<vmem>>, %arg5: memref<1x128xf32, #tpu.memory_space<vmem>>, %arg6: memref<8x128xf32, #tpu.memory_space<vmem>>) attributes {dimension_semantics = [#tpu.dimension_semantics<parallel>, #tpu.dimension_semantics<parallel>, #tpu.dimension_semantics<arbitrary>], iteration_bounds = array<i64: 1, 1, 1>, scalar_prefetch = 0 : i64, scratch_operands = 0 : i64, tpu.core_type = #tpu.core_type<tc>, window_params = [{transform_indices = @transform_0, window_bounds = array<i64: 8, 128>}, {transform_indices = @transform_1, window_bounds = array<i64: 128, 128>}, {transform_indices = @transform_2, window_bounds = array<i64: 1, 128>}, {transform_indices = @transform_3, window_bounds = array<i64: 8, 128>}]} {
    %c0_i32 = arith.constant 0 : i32
    %0 = arith.cmpi eq, %arg2, %c0_i32 : i32
    %1 = arith.extui %0 : i1 to i32
    %c0_i32_0 = arith.constant 0 : i32
    %2 = arith.cmpi ne, %1, %c0_i32_0 : i32
    scf.if %2 {
      %c0_8 = arith.constant 0 : index
      %c0_9 = arith.constant 0 : index
      %9 = vector.load %arg5[%c0_8, %c0_9] : memref<1x128xf32, #tpu.memory_space<vmem>>, vector<1x128xf32>
      %10 = vector.shape_cast %9 : vector<1x128xf32> to vector<1x128xf32>
      %11 = vector.broadcast %10 : vector<1x128xf32> to vector<8x128xf32>
      %c0_10 = arith.constant 0 : index
      %c0_11 = arith.constant 0 : index
      %12 = vector.load %arg6[%c0_10, %c0_11] : memref<8x128xf32, #tpu.memory_space<vmem>>, vector<8x128xf32>
      tpu.vector_store %arg6[%c0_10, %c0_11], %11 {strides = array<i32>} : memref<8x128xf32, #tpu.memory_space<vmem>>, vector<8x128xf32>,
    } else {
    }
    %c0 = arith.constant 0 : index
    %c0_1 = arith.constant 0 : index
    %3 = vector.load %arg6[%c0, %c0_1] : memref<8x128xf32, #tpu.memory_space<vmem>>, vector<8x128xf32>
    %c0_2 = arith.constant 0 : index
    %c0_3 = arith.constant 0 : index
    %4 = vector.load %arg3[%c0_2, %c0_3] : memref<8x128xbf16, #tpu.memory_space<vmem>>, vector<8x128xbf16>
    %c0_4 = arith.constant 0 : index
    %c0_5 = arith.constant 0 : index
    %5 = vector.load %arg4[%c0_4, %c0_5] : memref<128x128xbf16, #tpu.memory_space<vmem>>, vector<128x128xbf16>
    %cst = arith.constant dense<0.000000e+00> : vector<8x128xf32>
    %6 = tpu.matmul %4, %5, %cst {dimension_numbers = #tpu.dot_dimension_numbers<[1], [0], [0], [1], [0, 0, 1, 1], [], []>} : vector<8x128xbf16>, vector<128x128xbf16>, vector<8x128xf32> -> vector<8x128xf32>
    %7 = arith.addf %3, %6 : vector<8x128xf32>
    %c0_6 = arith.constant 0 : index
    %c0_7 = arith.constant 0 : index
    %8 = vector.load %arg6[%c0_6, %c0_7] : memref<8x128xf32, #tpu.memory_space<vmem>>, vector<8x128xf32>
    tpu.vector_store %arg6[%c0_6, %c0_7], %7 {strides = array<i32>} : memref<8x128xf32, #tpu.memory_space<vmem>>, vector<8x128xf32>,
    return
  }
  func.func @transform_0(%arg0: i32, %arg1: i32, %arg2: i32) -> (i32, i32) {
    %c0_i32 = arith.constant 0 : i32
    return %arg0, %arg2 : i32, i32
  }
  func.func @transform_1(%arg0: i32, %arg1: i32, %arg2: i32) -> (i32, i32) {
    %c0_i32 = arith.constant 0 : i32
    return %arg2, %arg1 : i32, i32
  }
  func.func @transform_2(%arg0: i32, %arg1: i32, %arg2: i32) -> (i32, i32) {
    %c0_i32 = arith.constant 0 : i32
    %c0_i32_0 = arith.constant 0 : i32
    return %c0_i32, %arg1 : i32, i32
  }
  func.func @transform_3(%arg0: i32, %arg1: i32, %arg2: i32) -> (i32, i32) {
    %c0_i32 = arith.constant 0 : i32
    return %arg0, %arg1 : i32, i32
  }
}

</mosaic_0001>

<llo_original>
// kernel: clinear_packed.1
$region0: #{clinear_packed.1}
  #allocation0 [shape = 'u32[]', space=smem, size = 0x4, offset = 0x4, fixed_abs, tag = 'smem constant byte address 0x4 - core index']
  #allocation1 [shape = 'u32[144,128]{1,0:T(1,128)}', space=vmem, size = 0x12000, scoped, tag = 'internal scratch']
  %s0 = inlined_call_operand.vmem [shape: bf16[8,128], index: 0, kind: input, shape index: {}]
  %s1 = inlined_call_operand.hbm [shape: bf16[128,128], index: 1, kind: input, shape index: {}]
  %s2 = inlined_call_operand.vmem [shape: f32[1,128], index: 2, kind: input, shape index: {}]
  %s3 = inlined_call_operand.hbm [shape: f32[8,128], index: 3, kind: output, shape index: {}]
  %s4 = sld [smem:[#allocation0]]
  $region30: #{clinear_packed.1} parent=0
    _
  %s6 = ssub.s32 1, %s4
  %s7 = scalar_select 0, %s6, %s4
  $region1: #{clinear_packed.1} parent=0
    #allocation2 [shape = 'u8[32768]{0}', space=vmem, size = 0x8000, scoped, tag = 'input window, operand 1, single buffered']
    #allocation3 [shape = 's32[1]{0}', space=sflag, size = 0x4, scoped, tag = 'scoped memory for clinear_packed.1']
    #allocation4 [shape = 's32[1]{0}', space=sflag, size = 0x4, scoped, tag = 'scoped memory for clinear_packed.1']
    #allocation5 [shape = 'u8[4096]{0}', space=vmem, size = 0x1000, scoped, tag = 'output window, operand 0, single buffered']
    %8 = vsyncpa [#allocation3], 0
    %9 = vsyncpa [#allocation4], 0
    // Predicated region
    $region2: #{clinear_packed.1} parent=1 // pred_check
      _
    $region3: #{clinear_packed.1} parent=1 // pred_check_branch
      %11 = sbr.rel (0) target = $region5
    $region4: #{clinear_packed.1} parent=1 // pred_region
      _
    $region5: #{clinear_packed.1} parent=1 // pred_fallthru
      _
    // Predicated region
    $region6: #{clinear_packed.1} parent=1 // pred_check
      _
    $region7: #{clinear_packed.1} parent=1 // pred_check_branch
      %13 = sbr.rel (0) target = $region9
    $region8: #{clinear_packed.1} parent=1 // pred_region
      %s15 = ssub.s32 1024, 1024
      %16 = vsyncadd [#allocation3], %s15
      %s17 = sshll.u32 [#allocation2], 4
      %s18 = int_to_ptr.vmem [resolvable:$true] %s17
      %23 = dma.hbm_to_vmem [thread:$0]  %s1, 1024, %s18, [#allocation3], 64, 64, 4
    $region9: #{clinear_packed.1} parent=1 // pred_fallthru
      _
    // Predicated region
    $region10: #{clinear_packed.1} parent=1 // pred_check
      _
    $region11: #{clinear_packed.1} parent=1 // pred_check_branch
      %25 = sbr.rel (0) target = $region13
    $region12: #{clinear_packed.1} parent=1 // pred_region
      _
    $region13: #{clinear_packed.1} parent=1 // pred_fallthru
      _
    // Predicated region
    $region14: #{clinear_packed.1} parent=1 // pred_check
      _
    $region15: #{clinear_packed.1} parent=1 // pred_check_branch
      %27 = sbr.rel (0) target = $region17
    $region16: #{clinear_packed.1} parent=1 // pred_region
      %28 = dma.done [#allocation3], 1024
    $region17: #{clinear_packed.1} parent=1 // pred_fallthru
      _
    %p30 = scmp.eq.s32.totalorder 0, 0
    // Predicated region
    $region18: #{clinear_packed.1} parent=1 // pred_check
      %p31 = pneg %p30
    $region19: #{clinear_packed.1} parent=1 // pred_check_branch
      %33 = sbr.rel (%p31) target = $region21
    $region20: #{clinear_packed.1} parent=1 // pred_region
      %v34 = vld [vmem:[%s2] sm:$0x1]
      %v36 = vlaneseq
      %v37 = vshrl.u32 %v36, 7
      %v38 = vsub.s32 0, %v37
      %v39 = vrot.slane %v34, %v38
      %41 = vst [vmem:[#allocation5] sm:$0xff] %v39
    $region21: #{clinear_packed.1} parent=1 // pred_fallthru
      _
    %v42 = vld [vmem:[#allocation5] sm:$0xff]
    %v43 = vld [vmem:[%s0] sm:$0xf]
    %v44 = vld [vmem:[#allocation2] sm:$0xf]
    %v45 = vld [vmem:[#allocation2 + $0x4] sm:$0xf]
    %v46 = vld [vmem:[#allocation2 + $0x8] sm:$0xf]
    %v47 = vld [vmem:[#allocation2 + $0xc] sm:$0xf]
    %v48 = vld [vmem:[#allocation2 + $0x10] sm:$0xf]
    %v49 = vld [vmem:[#allocation2 + $0x14] sm:$0xf]
    %v50 = vld [vmem:[#allocation2 + $0x18] sm:$0xf]
    %v51 = vld [vmem:[#allocation2 + $0x1c] sm:$0xf]
    %v52 = vld [vmem:[#allocation2 + $0x20] sm:$0xf]
    %v53 = vld [vmem:[#allocation2 + $0x24] sm:$0xf]
    %v54 = vld [vmem:[#allocation2 + $0x28] sm:$0xf]
    %v55 = vld [vmem:[#allocation2 + $0x2c] sm:$0xf]
    %v56 = vld [vmem:[#allocation2 + $0x30] sm:$0xf]
    %v57 = vld [vmem:[#allocation2 + $0x34] sm:$0xf]
    %v58 = vld [vmem:[#allocation2 + $0x38] sm:$0xf]
    %v59 = vld [vmem:[#allocation2 + $0x3c] sm:$0xf]
    %v76 = vunpack.c.l.b16 %v44
    %v77 = vunpack.c.l.b16 %v45
    %v78 = vunpack.c.l.b16 %v46
    %v79 = vunpack.c.l.b16 %v47
    %v80 = vunpack.c.l.b16 %v48
    %v81 = vunpack.c.l.b16 %v49
    %v82 = vunpack.c.l.b16 %v50
    %v83 = vunpack.c.l.b16 %v51
    %v84 = vunpack.c.l.b16 %v52
    %v85 = vunpack.c.l.b16 %v53
    %v86 = vunpack.c.l.b16 %v54
    %v87 = vunpack.c.l.b16 %v55
    %v88 = vunpack.c.l.b16 %v56
    %v89 = vunpack.c.l.b16 %v57
    %v90 = vunpack.c.l.b16 %v58
    %v91 = vunpack.c.l.b16 %v59
    %v92 = vpack.c.b16 %v77, %v76
    %v93 = vpack.c.b16 %v79, %v78
    %v94 = vpack.c.b16 %v81, %v80
    %v95 = vpack.c.b16 %v83, %v82
    %v96 = vpack.c.b16 %v85, %v84
    %v97 = vpack.c.b16 %v87, %v86
    %v98 = vpack.c.b16 %v89, %v88
    %v99 = vpack.c.b16 %v91, %v90
    %108 = vmatprep.subr.bf16.mxu0 0
    %109 = vmatpush1.bf16.msra.mxu0 %v99
    %110 = vmatprep.subr.bf16.mxu0 0
    %111 = vmatpush1.bf16.msra.mxu0 %v98
    %112 = vmatprep.subr.bf16.mxu0 0
    %113 = vmatpush1.bf16.msra.mxu0 %v97
    %114 = vmatprep.subr.bf16.mxu0 0
    %115 = vmatpush1.bf16.msra.mxu0 %v96
    %116 = vmatprep.subr.bf16.mxu0 0
    %117 = vmatpush1.bf16.msra.mxu0 %v95
    %118 = vmatprep.subr.bf16.mxu0 0
    %119 = vmatpush1.bf16.msra.mxu0 %v94
    %120 = vmatprep.subr.bf16.mxu0 0
    %121 = vmatpush1.bf16.msra.mxu0 %v93
    %122 = vmatprep.subr.bf16.mxu0 0
    %123 = vmatpush1.bf16.msra.mxu0 %v92
    %124 = vmatprep.subr.bf16.mxu0 0
    %125 = vmatpush2.bf16.msra.mxu0 0
    %126 = vmatprep.subr.bf16.mxu0 0
    %127 = vmatpush2.bf16.msra.mxu0 0
    %128 = vmatprep.subr.bf16.mxu0 0
    %129 = vmatpush2.bf16.msra.mxu0 0
    %130 = vmatprep.subr.bf16.mxu0 0
    %131 = vmatpush2.bf16.msra.mxu0 0
    %132 = vmatprep.subr.bf16.mxu0 0
    %133 = vmatpush2.bf16.msra.mxu0 0
    %134 = vmatprep.subr.bf16.mxu0 0
    %135 = vmatpush2.bf16.msra.mxu0 0
    %136 = vmatprep.subr.bf16.mxu0 0
    %137 = vmatpush2.bf16.msra.mxu0 0
    %138 = vmatprep.subr.bf16.mxu0 0
    %139 = vmatpush2.bf16.msra.mxu0 0
    %140 = vmatprep.mubr.bf16.mxu0 0
    %141 = vmatmul.mubr.bf16.gmra.mxu0 %v43
    %v142 = vpop.f32.mrf.mxu0
    %v143 = vadd.f32 0.0, %v142
    %v144 = vpop.f32.mrf.mxu0
    %v145 = vpop.f32.mrf.mxu0
    %v146 = vpop.f32.mrf.mxu0
    %147 = vdwg.mxu0
    %v148 = vadd.f32 %v42, %v143
    %149 = vst [vmem:[#allocation5] sm:$0xff] %v148
    // Predicated region
    $region22: #{clinear_packed.1} parent=1 // pred_check
      _
    $region23: #{clinear_packed.1} parent=1 // pred_check_branch
      %151 = sbr.rel (0) target = $region25
    $region24: #{clinear_packed.1} parent=1 // pred_region
      %s153 = ssub.s32 128, 128
      %154 = vsyncadd [#allocation4], %s153
      %s156 = sshll.u32 [#allocation5], 4
      %s157 = int_to_ptr.vmem [resolvable:$true] %s156
      %159 = dma.vmem_to_hbm [thread:$0]  %s157, 128, %s3, [#allocation4]
    $region25: #{clinear_packed.1} parent=1 // pred_fallthru
      _
    // Predicated region
    $region26: #{clinear_packed.1} parent=1 // pred_check
      _
    $region27: #{clinear_packed.1} parent=1 // pred_check_branch
      %161 = sbr.rel (0) target = $region29
    $region28: #{clinear_packed.1} parent=1 // pred_region
      %162 = dma.done [#allocation4], 128
    $region29: #{clinear_packed.1} parent=1 // pred_fallthru
      _
    %163 = vsyncpa [#allocation3], 1
    %164 = vsyncpa [#allocation4], 1

</llo_original>
